<compile_context>
chip_gen: v6e
topology: v6e:2x2x1
jax: 0.10.0
libtpu: 0.0.40
codegen_flags: <defaults>
</compile_context>

<pallas_src>
import functools

import jax
import jax.numpy as jnp
from jax.experimental import pallas as pl
from jax.experimental.pallas import tpu as pltpu


def _round_up(n, m):
    return (n + m - 1) // m * m


def _gelu_erf(y):
    # Exact GELU: 0.5*y*(1+erf(y/sqrt(2))).  erf via Abramowitz-Stegun 7.1.26
    # (|err| < 1.5e-7), avoids relying on an erf lowering rule in Mosaic.
    z = y * 0.7071067811865476
    az = jnp.abs(z)
    t = 1.0 / (1.0 + 0.3275911 * az)
    poly = t * (0.254829592 + t * (-0.284496736 + t * (1.421413741
               + t * (-1.453152027 + t * 1.061405429))))
    erf_abs = 1.0 - poly * jnp.exp(-az * az)
    erf = jnp.where(z >= 0.0, erf_abs, -erf_abs)
    return 0.5 * y * (1.0 + erf)


def fcu_down_kernel(x_ref, w_ref, b_ref, g_ref, beta_ref, o_ref, *, eps):
    # x_ref: (tm, C_in)  w_ref: (C_in, C_out)  b/g/beta: (1, C_out)  o_ref: (tm, C_out)
    # 1x1 conv == per-token matmul on the MXU with f32 accumulation.
    y = jnp.dot(x_ref[...], w_ref[...], preferred_element_type=jnp.float32)
    y = y + b_ref[...]
    # LayerNorm over channels (lane-axis reductions on the XLU).
    mean = jnp.mean(y, axis=-1, keepdims=True)
    yc = y - mean
    var = jnp.mean(yc * yc, axis=-1, keepdims=True)
    y = yc * jax.lax.rsqrt(var + eps)
    y = y * g_ref[...] + beta_ref[...]
    # Exact-erf GELU (EUP exp + VPU arithmetic), lane-dense store.
    o_ref[...] = _gelu_erf(y).astype(o_ref.dtype)


def fcu_down_forward(x, x_t, conv_w, conv_b, ln_gamma, ln_beta,
                     dw_stride, stations, eps=1e-6, block_rows=None):
    B, C_in, H, W = x.shape
    C_out = conv_w.shape[0]
    Hp, Wp = H // dw_stride, W // dw_stride
    P = Hp * Wp
    M = B * P

    # AvgPool (kernel=stride=dw_stride) commutes with the 1x1 conv, so pool the
    # *input* first: dw_stride^2 less data enters the matmul/LN/GELU kernel.
    # TODO(synk): the pooling + channels-last transpose is layout glue left to
    # XLA (one pass over the input); fusing it would need in-kernel NCHW reshapes.
    xp = x.reshape(B, C_in, Hp, dw_stride, Wp, dw_stride).mean(axis=(3, 5))
    tokens = xp.transpose(0, 2, 3, 1).reshape(M, C_in).astype(jnp.float32)

    # Large row tiles amortize the ~0.35us per-grid-step overhead; pad the row
    # count so the 1-D grid divides evenly (padded rows are discarded after).
    if block_rows is None:
        block_rows = 512 if M >= 512 else _round_up(M, 8)
    block_rows = min(_round_up(block_rows, 8), _round_up(M, 8))
    m_pad = _round_up(M, block_rows)
    if m_pad != M:
        tokens = jnp.pad(tokens, ((0, m_pad - M), (0, 0)))

    w_t = conv_w.reshape(C_out, C_in).T.astype(jnp.float32)      # (C_in, C_out)

    kernel = functools.partial(fcu_down_kernel, eps=eps)
    y = pl.pallas_call(
        kernel,
        out_shape=jax.ShapeDtypeStruct((m_pad, C_out), x.dtype),
        grid_spec=pltpu.PrefetchScalarGridSpec(
            num_scalar_prefetch=0,
            grid=(m_pad // block_rows,),
            in_specs=[
                pl.BlockSpec((block_rows, C_in), lambda i: (i, 0)),  # token tile
                pl.BlockSpec((C_in, C_out), lambda i: (0, 0)),       # full weight
                pl.BlockSpec((1, C_out), lambda i: (0, 0)),          # conv bias
                pl.BlockSpec((1, C_out), lambda i: (0, 0)),          # LN gamma
                pl.BlockSpec((1, C_out), lambda i: (0, 0)),          # LN beta
            ],
            out_specs=pl.BlockSpec((block_rows, C_out), lambda i: (i, 0)),
        ),
        compiler_params=pltpu.CompilerParams(
            dimension_semantics=("parallel",)),
    )(tokens, w_t, conv_b.reshape(1, C_out).astype(jnp.float32),
      ln_gamma.reshape(1, C_out).astype(jnp.float32),
      ln_beta.reshape(1, C_out).astype(jnp.float32))

    y = y[:M].reshape(B, P, C_out)
    # Prepend the station tokens from x_t (torch.cat in the original module).
    return jnp.concatenate([x_t[:, :stations, :].astype(y.dtype), y], axis=1)


def _reference(x, x_t, conv_w, conv_b, ln_g, ln_b, dw_stride, stations, eps=1e-6):
    # Pure-JAX mirror of the PyTorch FCUDown forward (conv -> pool -> LN -> GELU -> cat).
    B, C_in, H, W = x.shape
    C_out = conv_w.shape[0]
    w2 = conv_w.reshape(C_out, C_in)
    conv = jnp.einsum('oc,bchw->bohw', w2, x) + conv_b[None, :, None, None]
    Hp, Wp = H // dw_stride, W // dw_stride
    pooled = conv.reshape(B, C_out, Hp, dw_stride, Wp, dw_stride).mean(axis=(3, 5))
    tok = pooled.reshape(B, C_out, Hp * Wp).transpose(0, 2, 1)        # (B, P, C_out)
    mean = tok.mean(-1, keepdims=True)
    var = ((tok - mean) ** 2).mean(-1, keepdims=True)
    ln = (tok - mean) / jnp.sqrt(var + eps) * ln_g + ln_b
    act = jax.nn.gelu(ln, approximate=False)                          # exact erf GELU
    return jnp.concatenate([x_t[:, :stations, :], act], axis=1)


if __name__ == "__main__":
    B, stations = 2, 1
    inplanes, outplanes, dw_stride = 32, 128, 2
    H = W = 16
    Hp, Wp = H // dw_stride, W // dw_stride
    N_t = stations + Hp * Wp

    key = jax.random.PRNGKey(0)
    k = jax.random.split(key, 6)
    x = jax.random.normal(k[0], (B, inplanes, H, W), jnp.float32)
    x_t = jax.random.normal(k[1], (B, N_t, outplanes), jnp.float32)
    # Conv2d(inplanes, outplanes, kernel_size=1) parameters.
    conv_w = 0.1 * jax.random.normal(k[2], (outplanes, inplanes, 1, 1), jnp.float32)
    conv_b = 0.1 * jax.random.normal(k[3], (outplanes,), jnp.float32)
    # LayerNorm(outplanes, eps=1e-6) parameters.
    ln_gamma = 1.0 + 0.1 * jax.random.normal(k[4], (outplanes,), jnp.float32)
    ln_beta = 0.1 * jax.random.normal(k[5], (outplanes,), jnp.float32)

    out = fcu_down_forward(x, x_t, conv_w, conv_b, ln_gamma, ln_beta,
                           dw_stride, stations, block_rows=64)   # 2 grid steps
    out = jax.block_until_ready(out)

    ref = _reference(x, x_t, conv_w, conv_b, ln_gamma, ln_beta, dw_stride, stations)
    assert out.shape == (B, stations + Hp * Wp, outplanes), out.shape
    err = float(jnp.max(jnp.abs(out - ref)))
    assert jnp.allclose(out, ref, atol=2e-5, rtol=2e-5), err

    print("KERNEL_OK")
</pallas_src>

<mosaic_0001>
module attributes {stable_mosaic.version = 11 : i64} {
  func.func @fcu_down_kernel(%arg0: i32, %arg1: memref<64x32xf32, #tpu.memory_space<vmem>>, %arg2: memref<32x128xf32, #tpu.memory_space<vmem>>, %arg3: memref<1x128xf32, #tpu.memory_space<vmem>>, %arg4: memref<1x128xf32, #tpu.memory_space<vmem>>, %arg5: memref<1x128xf32, #tpu.memory_space<vmem>>, %arg6: memref<64x128xf32, #tpu.memory_space<vmem>>) attributes {dimension_semantics = [#tpu.dimension_semantics<parallel>], iteration_bounds = array<i64: 2>, scalar_prefetch = 0 : i64, scratch_operands = 0 : i64, tpu.core_type = #tpu.core_type<tc>, window_params = [{transform_indices = @transform_0, window_bounds = array<i64: 64, 32>}, {pipeline_mode = #tpu.pipeline_mode<synchronous>, transform_indices = @transform_1, window_bounds = array<i64: 32, 128>}, {pipeline_mode = #tpu.pipeline_mode<synchronous>, transform_indices = @transform_2, window_bounds = array<i64: 1, 128>}, {pipeline_mode = #tpu.pipeline_mode<synchronous>, transform_indices = @transform_3, window_bounds = array<i64: 1, 128>}, {pipeline_mode = #tpu.pipeline_mode<synchronous>, transform_indices = @transform_4, window_bounds = array<i64: 1, 128>}, {transform_indices = @transform_5, window_bounds = array<i64: 64, 128>}]} {
    %c0 = arith.constant 0 : index
    %c0_0 = arith.constant 0 : index
    %0 = vector.load %arg1[%c0, %c0_0] : memref<64x32xf32, #tpu.memory_space<vmem>>, vector<64x32xf32>
    %c0_1 = arith.constant 0 : index
    %c0_2 = arith.constant 0 : index
    %1 = vector.load %arg2[%c0_1, %c0_2] : memref<32x128xf32, #tpu.memory_space<vmem>>, vector<32x128xf32>
    %cst = arith.constant dense<0.000000e+00> : vector<64x128xf32>
    %2 = tpu.matmul %0, %1, %cst {dimension_numbers = #tpu.dot_dimension_numbers<[1], [0], [0], [1], [0, 0, 1, 1], [], []>} : vector<64x32xf32>, vector<32x128xf32>, vector<64x128xf32> -> vector<64x128xf32>
    %c0_3 = arith.constant 0 : index
    %c0_4 = arith.constant 0 : index
    %3 = vector.load %arg3[%c0_3, %c0_4] : memref<1x128xf32, #tpu.memory_space<vmem>>, vector<1x128xf32>
    %4 = vector.broadcast %3 : vector<1x128xf32> to vector<64x128xf32>
    %5 = arith.addf %2, %4 : vector<64x128xf32>
    %cst_5 = arith.constant dense<0.000000e+00> : vector<64xf32>
    %6 = vector.multi_reduction <add>, %5, %cst_5 [1] : vector<64x128xf32> to vector<64xf32>
    %7 = vector.shape_cast %6 : vector<64xf32> to vector<64x1xf32>
    %cst_6 = arith.constant 1.280000e+02 : f32
    %8 = vector.broadcast %cst_6 : f32 to vector<64x1xf32>
    %9 = arith.divf %7, %8 : vector<64x1xf32>
    %10 = vector.broadcast %9 : vector<64x1xf32> to vector<64x128xf32>
    %11 = arith.subf %5, %10 : vector<64x128xf32>
    %12 = arith.mulf %11, %11 : vector<64x128xf32>
    %cst_7 = arith.constant dense<0.000000e+00> : vector<64xf32>
    %13 = vector.multi_reduction <add>, %12, %cst_7 [1] : vector<64x128xf32> to vector<64xf32>
    %14 = vector.shape_cast %13 : vector<64xf32> to vector<64x1xf32>
    %cst_8 = arith.constant 1.280000e+02 : f32
    %15 = vector.broadcast %cst_8 : f32 to vector<64x1xf32>
    %16 = arith.divf %14, %15 : vector<64x1xf32>
    %cst_9 = arith.constant 9.99999997E-7 : f32
    %17 = vector.broadcast %cst_9 : f32 to vector<64x1xf32>
    %18 = arith.addf %16, %17 : vector<64x1xf32>
    %19 = math.rsqrt %18 : vector<64x1xf32>
    %20 = vector.broadcast %19 : vector<64x1xf32> to vector<64x128xf32>
    %21 = arith.mulf %11, %20 : vector<64x128xf32>
    %c0_10 = arith.constant 0 : index
    %c0_11 = arith.constant 0 : index
    %22 = vector.load %arg4[%c0_10, %c0_11] : memref<1x128xf32, #tpu.memory_space<vmem>>, vector<1x128xf32>
    %23 = vector.broadcast %22 : vector<1x128xf32> to vector<64x128xf32>
    %24 = arith.mulf %21, %23 : vector<64x128xf32>
    %c0_12 = arith.constant 0 : index
    %c0_13 = arith.constant 0 : index
    %25 = vector.load %arg5[%c0_12, %c0_13] : memref<1x128xf32, #tpu.memory_space<vmem>>, vector<1x128xf32>
    %26 = vector.broadcast %25 : vector<1x128xf32> to vector<64x128xf32>
    %27 = arith.addf %24, %26 : vector<64x128xf32>
    %cst_14 = arith.constant 0.707106769 : f32
    %28 = vector.broadcast %cst_14 : f32 to vector<64x128xf32>
    %29 = arith.mulf %27, %28 : vector<64x128xf32>
    %30 = math.absf %29 : vector<64x128xf32>
    %cst_15 = arith.constant 0.327591091 : f32
    %31 = vector.broadcast %cst_15 : f32 to vector<64x128xf32>
    %32 = arith.mulf %31, %30 : vector<64x128xf32>
    %cst_16 = arith.constant 1.000000e+00 : f32
    %33 = vector.broadcast %cst_16 : f32 to vector<64x128xf32>
    %34 = arith.addf %33, %32 : vector<64x128xf32>
    %cst_17 = arith.constant 1.000000e+00 : f32
    %35 = vector.broadcast %cst_17 : f32 to vector<64x128xf32>
    %36 = arith.divf %35, %34 : vector<64x128xf32>
    %cst_18 = arith.constant 1.06140542 : f32
    %37 = vector.broadcast %cst_18 : f32 to vector<64x128xf32>
    %38 = arith.mulf %36, %37 : vector<64x128xf32>
    %cst_19 = arith.constant -1.45315206 : f32
    %39 = vector.broadcast %cst_19 : f32 to vector<64x128xf32>
    %40 = arith.addf %39, %38 : vector<64x128xf32>
    %41 = arith.mulf %36, %40 : vector<64x128xf32>
    %cst_20 = arith.constant 1.42141378 : f32
    %42 = vector.broadcast %cst_20 : f32 to vector<64x128xf32>
    %43 = arith.addf %42, %41 : vector<64x128xf32>
    %44 = arith.mulf %36, %43 : vector<64x128xf32>
    %cst_21 = arith.constant -0.284496725 : f32
    %45 = vector.broadcast %cst_21 : f32 to vector<64x128xf32>
    %46 = arith.addf %45, %44 : vector<64x128xf32>
    %47 = arith.mulf %36, %46 : vector<64x128xf32>
    %cst_22 = arith.constant 0.254829586 : f32
    %48 = vector.broadcast %cst_22 : f32 to vector<64x128xf32>
    %49 = arith.addf %48, %47 : vector<64x128xf32>
    %50 = arith.mulf %36, %49 : vector<64x128xf32>
    %cst_23 = arith.constant 0.000000e+00 : f32
    %51 = vector.broadcast %cst_23 : f32 to vector<64x128xf32>
    %52 = arith.subf %51, %30 : vector<64x128xf32>
    %53 = arith.mulf %52, %30 : vector<64x128xf32>
    %54 = math.exp %53 : vector<64x128xf32>
    %55 = arith.mulf %50, %54 : vector<64x128xf32>
    %cst_24 = arith.constant 1.000000e+00 : f32
    %56 = vector.broadcast %cst_24 : f32 to vector<64x128xf32>
    %57 = arith.subf %56, %55 : vector<64x128xf32>
    %cst_25 = arith.constant 0.000000e+00 : f32
    %58 = vector.broadcast %cst_25 : f32 to vector<64x128xf32>
    %59 = arith.cmpf oge, %29, %58 : vector<64x128xf32>
    %cst_26 = arith.constant 0.000000e+00 : f32
    %60 = vector.broadcast %cst_26 : f32 to vector<64x128xf32>
    %61 = arith.subf %60, %57 : vector<64x128xf32>
    %62 = arith.select %59, %57, %61 : vector<64x128xi1>, vector<64x128xf32>
    %cst_27 = arith.constant 5.000000e-01 : f32
    %63 = vector.broadcast %cst_27 : f32 to vector<64x128xf32>
    %64 = arith.mulf %63, %27 : vector<64x128xf32>
    %cst_28 = arith.constant 1.000000e+00 : f32
    %65 = vector.broadcast %cst_28 : f32 to vector<64x128xf32>
    %66 = arith.addf %65, %62 : vector<64x128xf32>
    %67 = arith.mulf %64, %66 : vector<64x128xf32>
    %c0_29 = arith.constant 0 : index
    %c0_30 = arith.constant 0 : index
    %68 = vector.load %arg6[%c0_29, %c0_30] : memref<64x128xf32, #tpu.memory_space<vmem>>, vector<64x128xf32>
    tpu.vector_store %arg6[%c0_29, %c0_30], %67 {strides = array<i32>} : memref<64x128xf32, #tpu.memory_space<vmem>>, vector<64x128xf32>,
    return
  }
  func.func @transform_0(%arg0: i32) -> (i32, i32) {
    %c0_i32 = arith.constant 0 : i32
    %c0_i32_0 = arith.constant 0 : i32
    return %arg0, %c0_i32 : i32, i32
  }
  func.func @transform_1(%arg0: i32) -> (i32, i32) {
    %c0_i32 = arith.constant 0 : i32
    %c0_i32_0 = arith.constant 0 : i32
    %c0_i32_1 = arith.constant 0 : i32
    return %c0_i32, %c0_i32_0 : i32, i32
  }
  func.func @transform_2(%arg0: i32) -> (i32, i32) {
    %c0_i32 = arith.constant 0 : i32
    %c0_i32_0 = arith.constant 0 : i32
    %c0_i32_1 = arith.constant 0 : i32
    return %c0_i32, %c0_i32_0 : i32, i32
  }
  func.func @transform_3(%arg0: i32) -> (i32, i32) {
    %c0_i32 = arith.constant 0 : i32
    %c0_i32_0 = arith.constant 0 : i32
    %c0_i32_1 = arith.constant 0 : i32
    return %c0_i32, %c0_i32_0 : i32, i32
  }
  func.func @transform_4(%arg0: i32) -> (i32, i32) {
    %c0_i32 = arith.constant 0 : i32
    %c0_i32_0 = arith.constant 0 : i32
    %c0_i32_1 = arith.constant 0 : i32
    return %c0_i32, %c0_i32_0 : i32, i32
  }
  func.func @transform_5(%arg0: i32) -> (i32, i32) {
    %c0_i32 = arith.constant 0 : i32
    %c0_i32_0 = arith.constant 0 : i32
    return %arg0, %c0_i32 : i32, i32
  }
}

</mosaic_0001>

<llo_original>
// kernel: tpu_custom_call.1
$region0: #{tpu_custom_call.1}
  #allocation0 [shape = 'u32[]', space=smem, size = 0x4, offset = 0x4, fixed_abs, tag = 'smem constant byte address 0x4 - core index']
  #allocation1 [shape = 'u32[144,128]{1,0:T(1,128)}', space=vmem, size = 0x12000, scoped, tag = 'internal scratch']
  %s0 = inlined_call_operand.vmem [shape: f32[128,32], index: 0, kind: input, shape index: {}]
  %s1 = inlined_call_operand.vmem [shape: f32[32,128], index: 1, kind: input, shape index: {}]
  %s2 = inlined_call_operand.vmem [shape: f32[1,128], index: 2, kind: input, shape index: {}]
  %s3 = inlined_call_operand.vmem [shape: f32[1,128], index: 3, kind: input, shape index: {}]
  %s4 = inlined_call_operand.vmem [shape: f32[1,128], index: 4, kind: input, shape index: {}]
  %s5 = inlined_call_operand.hbm [shape: f32[128,128], index: 5, kind: output, shape index: {}]
  %s6 = sld [smem:[#allocation0]]
  $region53: #{tpu_custom_call.1} parent=0
    _
  %s8 = ssub.s32 1, %s6
  %s9 = scalar_select 0, %s8, %s6
  $region1: #{tpu_custom_call.1} parent=0
    #allocation2 [shape = 'u8[65536]{0}', space=vmem, size = 0x10000, scoped, tag = 'output window, operand 0']
    #allocation3 [shape = 's32[2]{0}', space=sflag, size = 0x8, scoped, tag = 'scoped memory for tpu_custom_call.1']
    %10 = vsyncpa [#allocation3], 0
    %s11 = scalar_lea.sflag [#allocation3], 1
    %12 = vsyncpa %s11, 0
    loop: start=0, step=1, limit=4
    $region2: #{tpu_custom_call.1} parent=1 // loop_pre_header
      _
    $region3: #{tpu_custom_call.1} parent=1 // loop_header
      %s14 = sphi 0, %s18
      %p15 = scmp.ge.s32.totalorder %s14, 4
      %s24 = sphi 0, %s26
      %s27 = sphi 0, %s24
      %s28 = sphi 0, %s27
      %s44 = sphi 0, %s28
      %s48 = sphi 0, %s48
      %s50 = sphi 0, %s48
      %s51 = sphi 0, %s50
      %s65 = sphi 0, %s51
      %s69 = sphi 0, %s69
      %s71 = sphi 0, %s69
      %s72 = sphi 0, %s71
      %s86 = sphi 0, %s72
      %s90 = sphi 0, %s90
      %s92 = sphi 0, %s90
      %s93 = sphi 0, %s92
      %s107 = sphi 0, %s93
      %s111 = sphi 0, %s111
      %s113 = sphi 0, %s111
      %s114 = sphi 0, %s113
      %s128 = sphi 0, %s114
      %s134 = sphi 0, %s136
      %s137 = sphi 0, %s134
      %s138 = sphi 0, %s137
      %s154 = sphi 0, %s138
    $region4: #{tpu_custom_call.1} parent=1 // loop_header_branch
      %17 = sbr.rel (%p15) target = $region8
    $region5: #{tpu_custom_call.1} parent=1 // loop_body
      %s19 = ssub.s32 %s14, 1
      %s20 = ssub.s32 %s14, 2
      %s21 = sadd.s32 %s14, 1
      %s22 = ssub.s32 %s14, %s21
      %p23 = scmp.eq.s32.totalorder %s22, 0
      %s25 = sadd.s32 %s24, 1
      %s26 = scalar_select %p23, %s24, %s25
      %p29 = pneg %p23
      %p30 = scmp.eq.s32.totalorder %s14, 1
      %p31 = por %p29, %p30
      %p32 = scmp.ne.s32.totalorder %s24, %s27
      %p33 = scmp.eq.s32.totalorder %s14, 0
      %p34 = por %p32, %p33
      %p35 = scmp.ne.s32.totalorder %s24, %s27
      %p36 = scmp.eq.s32.totalorder %s19, 1
      %p37 = por %p35, %p36
      %p38 = scmp.ne.s32.totalorder %s27, %s28
      %p39 = scmp.eq.s32.totalorder %s19, 0
      %p40 = por %p38, %p39
      %p41 = scmp.ne.s32.totalorder %s27, %s28
      %p42 = scmp.eq.s32.totalorder %s20, 1
      %p43 = por %p41, %p42
      %p45 = scmp.ne.s32.totalorder %s28, %s44
      %p46 = scmp.eq.s32.totalorder %s20, 0
      %p47 = por %p45, %p46
      %s49 = sadd.s32 %s48, 1
      %p52 = scmp.eq.s32.totalorder %s14, 1
      %p53 = scmp.ne.s32.totalorder %s48, %s50
      %p54 = scmp.eq.s32.totalorder %s14, 0
      %p55 = por %p53, %p54
      %p56 = scmp.ne.s32.totalorder %s48, %s50
      %p57 = scmp.eq.s32.totalorder %s19, 1
      %p58 = por %p56, %p57
      %p59 = scmp.ne.s32.totalorder %s50, %s51
      %p60 = scmp.eq.s32.totalorder %s19, 0
      %p61 = por %p59, %p60
      %p62 = scmp.ne.s32.totalorder %s50, %s51
      %p63 = scmp.eq.s32.totalorder %s20, 1
      %p64 = por %p62, %p63
      %p66 = scmp.ne.s32.totalorder %s51, %s65
      %p67 = scmp.eq.s32.totalorder %s20, 0
      %p68 = por %p66, %p67
      %s70 = sadd.s32 %s69, 1
      %p73 = scmp.eq.s32.totalorder %s14, 1
      %p74 = scmp.ne.s32.totalorder %s69, %s71
      %p75 = scmp.eq.s32.totalorder %s14, 0
      %p76 = por %p74, %p75
      %p77 = scmp.ne.s32.totalorder %s69, %s71
      %p78 = scmp.eq.s32.totalorder %s19, 1
      %p79 = por %p77, %p78
      %p80 = scmp.ne.s32.totalorder %s71, %s72
      %p81 = scmp.eq.s32.totalorder %s19, 0
      %p82 = por %p80, %p81
      %p83 = scmp.ne.s32.totalorder %s71, %s72
      %p84 = scmp.eq.s32.totalorder %s20, 1
      %p85 = por %p83, %p84
      %p87 = scmp.ne.s32.totalorder %s72, %s86
      %p88 = scmp.eq.s32.totalorder %s20, 0
      %p89 = por %p87, %p88
      %s91 = sadd.s32 %s90, 1
      %p94 = scmp.eq.s32.totalorder %s14, 1
      %p95 = scmp.ne.s32.totalorder %s90, %s92
      %p96 = scmp.eq.s32.totalorder %s14, 0
      %p97 = por %p95, %p96
      %p98 = scmp.ne.s32.totalorder %s90, %s92
      %p99 = scmp.eq.s32.totalorder %s19, 1
      %p100 = por %p98, %p99
      %p101 = scmp.ne.s32.totalorder %s92, %s93
      %p102 = scmp.eq.s32.totalorder %s19, 0
      %p103 = por %p101, %p102
      %p104 = scmp.ne.s32.totalorder %s92, %s93
      %p105 = scmp.eq.s32.totalorder %s20, 1
      %p106 = por %p104, %p105
      %p108 = scmp.ne.s32.totalorder %s93, %s107
      %p109 = scmp.eq.s32.totalorder %s20, 0
      %p110 = por %p108, %p109
      %s112 = sadd.s32 %s111, 1
      %p115 = scmp.eq.s32.totalorder %s14, 1
      %p116 = scmp.ne.s32.totalorder %s111, %s113
      %p117 = scmp.eq.s32.totalorder %s14, 0
      %p118 = por %p116, %p117
      %p119 = scmp.ne.s32.totalorder %s111, %s113
      %p120 = scmp.eq.s32.totalorder %s19, 1
      %p121 = por %p119, %p120
      %p122 = scmp.ne.s32.totalorder %s113, %s114
      %p123 = scmp.eq.s32.totalorder %s19, 0
      %p124 = por %p122, %p123
      %p125 = scmp.ne.s32.totalorder %s113, %s114
      %p126 = scmp.eq.s32.totalorder %s20, 1
      %p127 = por %p125, %p126
      %p129 = scmp.ne.s32.totalorder %s114, %s128
      %p130 = scmp.eq.s32.totalorder %s20, 0
      %p131 = por %p129, %p130
      %s132 = ssub.s32 %s14, %s21
      %p133 = scmp.eq.s32.totalorder %s132, 0
      %s135 = sadd.s32 %s134, 1
      %s136 = scalar_select %p133, %s134, %s135
      %p139 = pneg %p133
      %p140 = scmp.eq.s32.totalorder %s14, 1
      %p141 = por %p139, %p140
      %p142 = scmp.ne.s32.totalorder %s134, %s137
      %p143 = scmp.eq.s32.totalorder %s14, 0
      %p144 = por %p142, %p143
      %p145 = scmp.ne.s32.totalorder %s134, %s137
      %p146 = scmp.eq.s32.totalorder %s19, 1
      %p147 = por %p145, %p146
      %p148 = scmp.ne.s32.totalorder %s137, %s138
      %p149 = scmp.eq.s32.totalorder %s19, 0
      %p150 = por %p148, %p149
      %p151 = scmp.ne.s32.totalorder %s137, %s138
      %p152 = scmp.eq.s32.totalorder %s20, 1
      %p153 = por %p151, %p152
      %p155 = scmp.ne.s32.totalorder %s138, %s154
      %p156 = scmp.eq.s32.totalorder %s20, 0
      %p157 = por %p155, %p156
      %p158 = scmp.le.s32.totalorder 1, %s14
      %p159 = scmp.lt.s32.totalorder %s14, 3
      %p160 = pnand %p158, %p159
      %p161 = pneg %p160
      // Predicated region
      $region9: #{tpu_custom_call.1} parent=5 // pred_check
        _
      $region10: #{tpu_custom_call.1} parent=5 // pred_check_branch
        %163 = sbr.rel (%p160) target = $region12
      $region11: #{tpu_custom_call.1} parent=5 // pred_region
        %s164 = ssub.s32 %s14, 1
        // Predicated region
        $region13: #{tpu_custom_call.1} parent=11 // pred_check
          %p165 = pneg %p61
        $region14: #{tpu_custom_call.1} parent=11 // pred_check_branch
          %167 = sbr.rel (%p165) target = $region16
        $region15: #{tpu_custom_call.1} parent=11 // pred_region
          _
        $region16: #{tpu_custom_call.1} parent=11 // pred_fallthru
          _
        // Predicated region
        $region17: #{tpu_custom_call.1} parent=11 // pred_check
          %p168 = pneg %p82
        $region18: #{tpu_custom_call.1} parent=11 // pred_check_branch
          %170 = sbr.rel (%p168) target = $region20
        $region19: #{tpu_custom_call.1} parent=11 // pred_region
          _
        $region20: #{tpu_custom_call.1} parent=11 // pred_fallthru
          _
        // Predicated region
        $region21: #{tpu_custom_call.1} parent=11 // pred_check
          %p171 = pneg %p103
        $region22: #{tpu_custom_call.1} parent=11 // pred_check_branch
          %173 = sbr.rel (%p171) target = $region24
        $region23: #{tpu_custom_call.1} parent=11 // pred_region
          _
        $region24: #{tpu_custom_call.1} parent=11 // pred_fallthru
          _
        // Predicated region
        $region25: #{tpu_custom_call.1} parent=11 // pred_check
          %p174 = pneg %p124
        $region26: #{tpu_custom_call.1} parent=11 // pred_check_branch
          %176 = sbr.rel (%p174) target = $region28
        $region27: #{tpu_custom_call.1} parent=11 // pred_region
          _
        $region28: #{tpu_custom_call.1} parent=11 // pred_fallthru
          _
      $region12: #{tpu_custom_call.1} parent=5 // pred_fallthru
        _
      %p177 = scmp.lt.s32.totalorder %s14, 2
      // Predicated region
      $region29: #{tpu_custom_call.1} parent=5 // pred_check
        %p178 = pneg %p177
      $region30: #{tpu_custom_call.1} parent=5 // pred_check_branch
        %180 = sbr.rel (%p178) target = $region32
      $region31: #{tpu_custom_call.1} parent=5 // pred_region
        // Predicated region
        $region33: #{tpu_custom_call.1} parent=31 // pred_check
          %p181 = pneg %p34
        $region34: #{tpu_custom_call.1} parent=31 // pred_check_branch
          %183 = sbr.rel (%p181) target = $region36
        $region35: #{tpu_custom_call.1} parent=31 // pred_region
          %s184 = smul.u32 8, %s14
          %p185 = scmp.lt.s32.totalorder %s184, 15
          %s186 = scalar_select %p185, %s184, 15
          %s187 = smul.addr %s186, 8
          %s188 = scalar_lea.vmem %s0, %s187
          %s189 = smul.u32 8, %s14
        $region36: #{tpu_custom_call.1} parent=31 // pred_fallthru
          _
      $region32: #{tpu_custom_call.1} parent=5 // pred_fallthru
        _
      %p190 = scmp.le.s32.totalorder 1, %s14
      %p191 = scmp.lt.s32.totalorder %s14, 3
      %p192 = pnand %p190, %p191
      %p193 = pneg %p192
      // Predicated region
      $region37: #{tpu_custom_call.1} parent=5 // pred_check
        _
      $region38: #{tpu_custom_call.1} parent=5 // pred_check_branch
        %195 = sbr.rel (%p192) target = $region40
      $region39: #{tpu_custom_call.1} parent=5 // pred_region
        %s196 = ssub.s32 %s14, 1
        %s197 = smul.u32 8, %s19
        %p198 = scmp.lt.s32.totalorder %s197, 15
        %s199 = scalar_select %p198, %s197, 15
        %s200 = smul.addr %s199, 8
        %s201 = scalar_lea.vmem %s0, %s200
        %p202 = pneg %p40
        %p203 = pneg %p37
        %p204 = pneg %p61
        %p205 = pneg %p58
        %p206 = pneg %p82
        %p207 = pneg %p79
        %p208 = pneg %p103
        %p209 = pneg %p100
        %p210 = pneg %p124
        %p211 = pneg %p121
        %p212 = pneg %p150
        %p213 = pneg %p147
        %s214 = sand.u32 %s137, 1
        %s215 = scalar_lea.sflag [#allocation3], %s214
        %s216 = sand.u32 %s137, 1
        %s217 = smul.addr %s216, 64
        %s218 = scalar_lea.vmem [#allocation2], %s217
        %s219 = smul.u32 8, %s19
        %p220 = scmp.lt.s32.totalorder %s219, 15
        %s221 = scalar_select %p220, %s219, 15
        %s222 = smul.addr %s221, 8
        %s223 = scalar_lea.vmem %s0, %s222
        %s224 = smul.u32 8, %s19
        %s225 = smul.u32 8, %s19
        %v226 = vld [vmem:[%s223] sm:$0xff]
        %v227 = vld [vmem:[%s223 + $0x8] sm:$0xff]
        %v228 = vld [vmem:[%s223 + $0x10] sm:$0xff]
        %v229 = vld [vmem:[%s223 + $0x18] sm:$0xff]
        %v230 = vld [vmem:[%s223 + $0x20] sm:$0xff]
        %v231 = vld [vmem:[%s223 + $0x28] sm:$0xff]
        %v232 = vld [vmem:[%s223 + $0x30] sm:$0xff]
        %v233 = vld [vmem:[%s223 + $0x38] sm:$0xff]
        %v234 = vld [vmem:[%s1] sm:$0xff]
        %v235 = vld [vmem:[%s1 + $0x8] sm:$0xff]
        %v236 = vld [vmem:[%s1 + $0x10] sm:$0xff]
        %v237 = vld [vmem:[%s1 + $0x18] sm:$0xff]
        %v238 = vld [vmem:[%s2] sm:$0x1]
        %v240 = vlaneseq
        %v241 = vshrl.u32 %v240, 7
        %v242 = vsub.s32 0, %v241
        %v243 = vrot.slane %v238, %v242
        %vm245 = vcmask 261120
        %v247 = vsel %vm245, %v226, 0
        %v250 = vsel %vm245, %v227, 0
        %v253 = vsel %vm245, %v228, 0
        %v256 = vsel %vm245, %v229, 0
        %v259 = vsel %vm245, %v230, 0
        %v262 = vsel %vm245, %v231, 0
        %v265 = vsel %vm245, %v232, 0
        %v268 = vsel %vm245, %v233, 0
        %270 = vmatprep.subr.mxu0 0.0
        %271 = vmatpush1.msra.mxu0 0.0
        %272 = vmatprep.subr.mxu0 0.0
        %273 = vmatpush1.msra.mxu0 0.0
        %274 = vmatprep.subr.mxu0 0.0
        %275 = vmatpush1.msra.mxu0 0.0
        %276 = vmatprep.subr.mxu0 0.0
        %277 = vmatpush1.msra.mxu0 0.0
        %278 = vmatprep.subr.mxu0 0.0
        %279 = vmatpush1.msra.mxu0 0.0
        %280 = vmatprep.subr.mxu0 0.0
        %281 = vmatpush1.msra.mxu0 0.0
        %282 = vmatprep.subr.mxu0 0.0
        %283 = vmatpush1.msra.mxu0 0.0
        %284 = vmatprep.subr.mxu0 0.0
        %285 = vmatpush1.msra.mxu0 0.0
        %286 = vmatprep.subr.mxu0 0.0
        %287 = vmatpush1.msra.mxu0 0.0
        %288 = vmatprep.subr.mxu0 0.0
        %289 = vmatpush1.msra.mxu0 0.0
        %290 = vmatprep.subr.mxu0 0.0
        %291 = vmatpush1.msra.mxu0 0.0
        %292 = vmatprep.subr.mxu0 0.0
        %293 = vmatpush1.msra.mxu0 0.0
        %294 = vmatprep.subr.mxu0 0.0
        %295 = vmatpush1.msra.mxu0 %v237
        %296 = vmatprep.subr.mxu0 0.0
        %297 = vmatpush1.msra.mxu0 %v236
        %298 = vmatprep.subr.mxu0 0.0
        %299 = vmatpush1.msra.mxu0 %v235
        %300 = vmatprep.subr.mxu0 0.0
        %301 = vmatpush1.msra.mxu0 %v234
        %302 = vmatprep.subr.mxu0 0.0
        %303 = vmatpush2.msra.mxu0 0.0
        %304 = vmatprep.subr.mxu0 0.0
        %305 = vmatpush2.msra.mxu0 0.0
        %306 = vmatprep.subr.mxu0 0.0
        %307 = vmatpush2.msra.mxu0 0.0
        %308 = vmatprep.subr.mxu0 0.0
        %309 = vmatpush2.msra.mxu0 0.0
        %310 = vmatprep.subr.mxu0 0.0
        %311 = vmatpush2.msra.mxu0 0.0
        %312 = vmatprep.subr.mxu0 0.0
        %313 = vmatpush2.msra.mxu0 0.0
        %314 = vmatprep.subr.mxu0 0.0
        %315 = vmatpush2.msra.mxu0 0.0
        %316 = vmatprep.subr.mxu0 0.0
        %317 = vmatpush2.msra.mxu0 0.0
        %318 = vmatprep.subr.mxu0 0.0
        %319 = vmatpush2.msra.mxu0 0.0
        %320 = vmatprep.subr.mxu0 0.0
        %321 = vmatpush2.msra.mxu0 0.0
        %322 = vmatprep.subr.mxu0 0.0
        %323 = vmatpush2.msra.mxu0 0.0
        %324 = vmatprep.subr.mxu0 0.0
        %325 = vmatpush2.msra.mxu0 0.0
        %326 = vmatprep.subr.mxu0 0.0
        %327 = vmatpush2.msra.mxu0 0.0
        %328 = vmatprep.subr.mxu0 0.0
        %329 = vmatpush2.msra.mxu0 0.0
        %330 = vmatprep.subr.mxu0 0.0
        %331 = vmatpush2.msra.mxu0 0.0
        %332 = vmatprep.subr.mxu0 0.0
        %333 = vmatpush2.msra.mxu0 0.0
        %334 = vmatprep.mubr.f32.mxu0 0.0
        %335 = vmatmul.mubr.f32.gmra.mxu0 %v247
        %v336 = vpop.f32.mrf.mxu0
        %v337 = vadd.f32 %v243, %v336
        %v338 = vpop.f32.mrf.mxu0
        %339 = vmatprep.mubr.f32.mxu0 0.0
        %340 = vmatmul.mubr.f32.gmra.mxu0 %v250
        %v341 = vpop.f32.mrf.mxu0
        %v342 = vadd.f32 %v243, %v341
        %v343 = vpop.f32.mrf.mxu0
        %344 = vmatprep.mubr.f32.mxu0 0.0
        %345 = vmatmul.mubr.f32.gmra.mxu0 %v253
        %v346 = vpop.f32.mrf.mxu0
        %v347 = vadd.f32 %v243, %v346
        %v348 = vpop.f32.mrf.mxu0
        %349 = vmatprep.mubr.f32.mxu0 0.0
        %350 = vmatmul.mubr.f32.gmra.mxu0 %v256
        %v351 = vpop.f32.mrf.mxu0
        %v352 = vadd.f32 %v243, %v351
        %v353 = vpop.f32.mrf.mxu0
        %354 = vmatprep.mubr.f32.mxu0 0.0
        %355 = vmatmul.mubr.f32.gmra.mxu0 %v259
        %v356 = vpop.f32.mrf.mxu0
        %v357 = vadd.f32 %v243, %v356
        %v358 = vpop.f32.mrf.mxu0
        %359 = vmatprep.mubr.f32.mxu0 0.0
        %360 = vmatmul.mubr.f32.gmra.mxu0 %v262
        %v361 = vpop.f32.mrf.mxu0
        %v362 = vadd.f32 %v243, %v361
        %v363 = vpop.f32.mrf.mxu0
        %364 = vmatprep.mubr.f32.mxu0 0.0
        %365 = vmatmul.mubr.f32.gmra.mxu0 %v265
        %v366 = vpop.f32.mrf.mxu0
        %v367 = vadd.f32 %v243, %v366
        %v368 = vpop.f32.mrf.mxu0
        %369 = vmatprep.mubr.f32.mxu0 0.0
        %370 = vmatmul.mubr.f32.gmra.mxu0 %v268
        %v371 = vpop.f32.mrf.mxu0
        %v372 = vadd.f32 %v243, %v371
        %v373 = vpop.f32.mrf.mxu0
        %374 = vdwg.mxu0
        %375 = vadd.xlane.f32.xlu0 %v337
        %v376 = vpop.xlane.xlu0 %375
        %377 = vadd.xlane.f32.xlu0 %v342
        %v378 = vpop.xlane.xlu0 %377
        %379 = vadd.xlane.f32.xlu0 %v347
        %v380 = vpop.xlane.xlu0 %379
        %381 = vadd.xlane.f32.xlu0 %v352
        %v382 = vpop.xlane.xlu0 %381
        %383 = vadd.xlane.f32.xlu0 %v357
        %v384 = vpop.xlane.xlu0 %383
        %385 = vadd.xlane.f32.xlu0 %v362
        %v386 = vpop.xlane.xlu0 %385
        %387 = vadd.xlane.f32.xlu0 %v367
        %v388 = vpop.xlane.xlu0 %387
        %389 = vadd.xlane.f32.xlu0 %v372
        %v390 = vpop.xlane.xlu0 %389
        %v391 = vrcp.pop 128.0
        %v392 = vmul.f32 %v376, %v391
        %v393 = vmul.f32 %v378, %v391
        %v394 = vmul.f32 %v380, %v391
        %v395 = vmul.f32 %v382, %v391
        %v396 = vmul.f32 %v384, %v391
        %v397 = vmul.f32 %v386, %v391
        %v398 = vmul.f32 %v388, %v391
        %v399 = vmul.f32 %v390, %v391
        %v400 = vsub.f32 %v337, %v392
        %v401 = vsub.f32 %v342, %v393
        %v402 = vsub.f32 %v347, %v394
        %v403 = vsub.f32 %v352, %v395
        %v404 = vsub.f32 %v357, %v396
        %v405 = vsub.f32 %v362, %v397
        %v406 = vsub.f32 %v367, %v398
        %v407 = vsub.f32 %v372, %v399
        %v408 = vmul.f32 %v400, %v400
        %v409 = vmul.f32 %v401, %v401
        %v410 = vmul.f32 %v402, %v402
        %v411 = vmul.f32 %v403, %v403
        %v412 = vmul.f32 %v404, %v404
        %v413 = vmul.f32 %v405, %v405
        %v414 = vmul.f32 %v406, %v406
        %v415 = vmul.f32 %v407, %v407
        %416 = vadd.xlane.f32.xlu0 %v408
        %v417 = vpop.xlane.xlu0 %416
        %418 = vadd.xlane.f32.xlu0 %v409
        %v419 = vpop.xlane.xlu0 %418
        %420 = vadd.xlane.f32.xlu0 %v410
        %v421 = vpop.xlane.xlu0 %420
        %422 = vadd.xlane.f32.xlu0 %v411
        %v423 = vpop.xlane.xlu0 %422
        %424 = vadd.xlane.f32.xlu0 %v412
        %v425 = vpop.xlane.xlu0 %424
        %426 = vadd.xlane.f32.xlu0 %v413
        %v427 = vpop.xlane.xlu0 %426
        %428 = vadd.xlane.f32.xlu0 %v414
        %v429 = vpop.xlane.xlu0 %428
        %430 = vadd.xlane.f32.xlu0 %v415
        %v431 = vpop.xlane.xlu0 %430
        %v432 = vmul.f32 %v417, %v391
        %v433 = vmul.f32 %v419, %v391
        %v434 = vmul.f32 %v421, %v391
        %v435 = vmul.f32 %v423, %v391
        %v436 = vmul.f32 %v425, %v391
        %v437 = vmul.f32 %v427, %v391
        %v438 = vmul.f32 %v429, %v391
        %v439 = vmul.f32 %v431, %v391
        %v440 = vadd.f32 %v432, 1e-06
        %v441 = vadd.f32 %v433, 1e-06
        %v442 = vadd.f32 %v434, 1e-06
        %v443 = vadd.f32 %v435, 1e-06
        %v444 = vadd.f32 %v436, 1e-06
        %v445 = vadd.f32 %v437, 1e-06
        %v446 = vadd.f32 %v438, 1e-06
        %v447 = vadd.f32 %v439, 1e-06
        %v448 = vrsqrt.pop %v440
        %v449 = vrsqrt.pop %v441
        %v450 = vrsqrt.pop %v442
        %v451 = vrsqrt.pop %v443
        %v452 = vrsqrt.pop %v444
        %v453 = vrsqrt.pop %v445
        %v454 = vrsqrt.pop %v446
        %v455 = vrsqrt.pop %v447
        %v456 = vmul.f32 %v400, %v448
        %v457 = vmul.f32 %v401, %v449
        %v458 = vmul.f32 %v402, %v450
        %v459 = vmul.f32 %v403, %v451
        %v460 = vmul.f32 %v404, %v452
        %v461 = vmul.f32 %v405, %v453
        %v462 = vmul.f32 %v406, %v454
        %v463 = vmul.f32 %v407, %v455
        %v464 = vld [vmem:[%s3] sm:$0x1]
        %v466 = vlaneseq
        %v467 = vshrl.u32 %v466, 7
        %v468 = vsub.s32 0, %v467
        %v469 = vrot.slane %v464, %v468
        %v471 = vmul.f32 %v456, %v469
        %v472 = vmul.f32 %v457, %v469
        %v473 = vmul.f32 %v458, %v469
        %v474 = vmul.f32 %v459, %v469
        %v475 = vmul.f32 %v460, %v469
        %v476 = vmul.f32 %v461, %v469
        %v477 = vmul.f32 %v462, %v469
        %v478 = vmul.f32 %v463, %v469
        %v479 = vld [vmem:[%s4] sm:$0x1]
        %v481 = vlaneseq
        %v482 = vshrl.u32 %v481, 7
        %v483 = vsub.s32 0, %v482
        %v484 = vrot.slane %v479, %v483
        %v486 = vadd.f32 %v471, %v484
        %v487 = vadd.f32 %v472, %v484
        %v488 = vadd.f32 %v473, %v484
        %v489 = vadd.f32 %v474, %v484
        %v490 = vadd.f32 %v475, %v484
        %v491 = vadd.f32 %v476, %v484
        %v492 = vadd.f32 %v477, %v484
        %v493 = vadd.f32 %v478, %v484
        %v494 = vmul.f32 %v486, 0.70710677
        %v495 = vmul.f32 %v487, 0.70710677
        %v496 = vmul.f32 %v488, 0.70710677
        %v497 = vmul.f32 %v489, 0.70710677
        %v498 = vmul.f32 %v490, 0.70710677
        %v499 = vmul.f32 %v491, 0.70710677
        %v500 = vmul.f32 %v492, 0.70710677
        %v501 = vmul.f32 %v493, 0.70710677
        %v502 = vand.u32 2147483647, %v494
        %v503 = vand.u32 2147483647, %v495
        %v504 = vand.u32 2147483647, %v496
        %v505 = vand.u32 2147483647, %v497
        %v506 = vand.u32 2147483647, %v498
        %v507 = vand.u32 2147483647, %v499
        %v508 = vand.u32 2147483647, %v500
        %v509 = vand.u32 2147483647, %v501
        %v510 = vmul.f32 %v502, 0.3275911
        %v511 = vmul.f32 %v503, 0.3275911
        %v512 = vmul.f32 %v504, 0.3275911
        %v513 = vmul.f32 %v505, 0.3275911
        %v514 = vmul.f32 %v506, 0.3275911
        %v515 = vmul.f32 %v507, 0.3275911
        %v516 = vmul.f32 %v508, 0.3275911
        %v517 = vmul.f32 %v509, 0.3275911
        %v518 = vadd.f32 %v510, 1.0
        %v519 = vadd.f32 %v511, 1.0
        %v520 = vadd.f32 %v512, 1.0
        %v521 = vadd.f32 %v513, 1.0
        %v522 = vadd.f32 %v514, 1.0
        %v523 = vadd.f32 %v515, 1.0
        %v524 = vadd.f32 %v516, 1.0
        %v525 = vadd.f32 %v517, 1.0
        %v526 = vrcp.pop %v518
        %v527 = vmul.f32 1.0, %v526
        %v528 = vrcp.pop %v519
        %v529 = vmul.f32 1.0, %v528
        %v530 = vrcp.pop %v520
        %v531 = vmul.f32 1.0, %v530
        %v532 = vrcp.pop %v521
        %v533 = vmul.f32 1.0, %v532
        %v534 = vrcp.pop %v522
        %v535 = vmul.f32 1.0, %v534
        %v536 = vrcp.pop %v523
        %v537 = vmul.f32 1.0, %v536
        %v538 = vrcp.pop %v524
        %v539 = vmul.f32 1.0, %v538
        %v540 = vrcp.pop %v525
        %v541 = vmul.f32 1.0, %v540
        %v542 = vmul.f32 %v527, 1.0614054
        %v543 = vmul.f32 %v529, 1.0614054
        %v544 = vmul.f32 %v531, 1.0614054
        %v545 = vmul.f32 %v533, 1.0614054
        %v546 = vmul.f32 %v535, 1.0614054
        %v547 = vmul.f32 %v537, 1.0614054
        %v548 = vmul.f32 %v539, 1.0614054
        %v549 = vmul.f32 %v541, 1.0614054
        %v550 = vadd.f32 %v542, -1.4531521
        %v551 = vadd.f32 %v543, -1.4531521
        %v552 = vadd.f32 %v544, -1.4531521
        %v553 = vadd.f32 %v545, -1.4531521
        %v554 = vadd.f32 %v546, -1.4531521
        %v555 = vadd.f32 %v547, -1.4531521
        %v556 = vadd.f32 %v548, -1.4531521
        %v557 = vadd.f32 %v549, -1.4531521
        %v558 = vmul.f32 %v527, %v550
        %v559 = vmul.f32 %v529, %v551
        %v560 = vmul.f32 %v531, %v552
        %v561 = vmul.f32 %v533, %v553
        %v562 = vmul.f32 %v535, %v554
        %v563 = vmul.f32 %v537, %v555
        %v564 = vmul.f32 %v539, %v556
        %v565 = vmul.f32 %v541, %v557
        %v566 = vadd.f32 %v558, 1.4214138
        %v567 = vadd.f32 %v559, 1.4214138
        %v568 = vadd.f32 %v560, 1.4214138
        %v569 = vadd.f32 %v561, 1.4214138
        %v570 = vadd.f32 %v562, 1.4214138
        %v571 = vadd.f32 %v563, 1.4214138
        %v572 = vadd.f32 %v564, 1.4214138
        %v573 = vadd.f32 %v565, 1.4214138
        %v574 = vmul.f32 %v527, %v566
        %v575 = vmul.f32 %v529, %v567
        %v576 = vmul.f32 %v531, %v568
        %v577 = vmul.f32 %v533, %v569
        %v578 = vmul.f32 %v535, %v570
        %v579 = vmul.f32 %v537, %v571
        %v580 = vmul.f32 %v539, %v572
        %v581 = vmul.f32 %v541, %v573
        %v582 = vadd.f32 %v574, -0.28449672
        %v583 = vadd.f32 %v575, -0.28449672
        %v584 = vadd.f32 %v576, -0.28449672
        %v585 = vadd.f32 %v577, -0.28449672
        %v586 = vadd.f32 %v578, -0.28449672
        %v587 = vadd.f32 %v579, -0.28449672
        %v588 = vadd.f32 %v580, -0.28449672
        %v589 = vadd.f32 %v581, -0.28449672
        %v590 = vmul.f32 %v527, %v582
        %v591 = vmul.f32 %v529, %v583
        %v592 = vmul.f32 %v531, %v584
        %v593 = vmul.f32 %v533, %v585
        %v594 = vmul.f32 %v535, %v586
        %v595 = vmul.f32 %v537, %v587
        %v596 = vmul.f32 %v539, %v588
        %v597 = vmul.f32 %v541, %v589
        %v598 = vadd.f32 %v590, 0.2548296
        %v599 = vadd.f32 %v591, 0.2548296
        %v600 = vadd.f32 %v592, 0.2548296
        %v601 = vadd.f32 %v593, 0.2548296
        %v602 = vadd.f32 %v594, 0.2548296
        %v603 = vadd.f32 %v595, 0.2548296
        %v604 = vadd.f32 %v596, 0.2548296
        %v605 = vadd.f32 %v597, 0.2548296
        %v606 = vmul.f32 %v527, %v598
        %v607 = vmul.f32 %v529, %v599
        %v608 = vmul.f32 %v531, %v600
        %v609 = vmul.f32 %v533, %v601
        %v610 = vmul.f32 %v535, %v602
        %v611 = vmul.f32 %v537, %v603
        %v612 = vmul.f32 %v539, %v604
        %v613 = vmul.f32 %v541, %v605
        %v614 = vsub.f32 0.0, %v502
        %v615 = vsub.f32 0.0, %v503
        %v616 = vsub.f32 0.0, %v504
        %v617 = vsub.f32 0.0, %v505
        %v618 = vsub.f32 0.0, %v506
        %v619 = vsub.f32 0.0, %v507
        %v620 = vsub.f32 0.0, %v508
        %v621 = vsub.f32 0.0, %v509
        %v622 = vmul.f32 %v614, %v502
        %v623 = vmul.f32 %v615, %v503
        %v624 = vmul.f32 %v616, %v504
        %v625 = vmul.f32 %v617, %v505
        %v626 = vmul.f32 %v618, %v506
        %v627 = vmul.f32 %v619, %v507
        %v628 = vmul.f32 %v620, %v508
        %v629 = vmul.f32 %v621, %v509
        %v630 = vmul.f32 %v622, 1.442695
        %v631 = vpow.pop %v630
        %v632 = vmul.f32 %v623, 1.442695
        %v633 = vpow.pop %v632
        %v634 = vmul.f32 %v624, 1.442695
        %v635 = vpow.pop %v634
        %v636 = vmul.f32 %v625, 1.442695
        %v637 = vpow.pop %v636
        %v638 = vmul.f32 %v626, 1.442695
        %v639 = vpow.pop %v638
        %v640 = vmul.f32 %v627, 1.442695
        %v641 = vpow.pop %v640
        %v642 = vmul.f32 %v628, 1.442695
        %v643 = vpow.pop %v642
        %v644 = vmul.f32 %v629, 1.442695
        %v645 = vpow.pop %v644
        %v646 = vmul.f32 %v606, %v631
        %v647 = vmul.f32 %v607, %v633
        %v648 = vmul.f32 %v608, %v635
        %v649 = vmul.f32 %v609, %v637
        %v650 = vmul.f32 %v610, %v639
        %v651 = vmul.f32 %v611, %v641
        %v652 = vmul.f32 %v612, %v643
        %v653 = vmul.f32 %v613, %v645
        %v654 = vsub.f32 1.0, %v646
        %v655 = vsub.f32 1.0, %v647
        %v656 = vsub.f32 1.0, %v648
        %v657 = vsub.f32 1.0, %v649
        %v658 = vsub.f32 1.0, %v650
        %v659 = vsub.f32 1.0, %v651
        %v660 = vsub.f32 1.0, %v652
        %v661 = vsub.f32 1.0, %v653
        %vm662 = vcmp.ge.f32.partialorder %v494, 0.0
        %vm663 = vcmp.ge.f32.partialorder %v495, 0.0
        %vm664 = vcmp.ge.f32.partialorder %v496, 0.0
        %vm665 = vcmp.ge.f32.partialorder %v497, 0.0
        %vm666 = vcmp.ge.f32.partialorder %v498, 0.0
        %vm667 = vcmp.ge.f32.partialorder %v499, 0.0
        %vm668 = vcmp.ge.f32.partialorder %v500, 0.0
        %vm669 = vcmp.ge.f32.partialorder %v501, 0.0
        %v670 = vsub.f32 0.0, %v654
        %v671 = vsub.f32 0.0, %v655
        %v672 = vsub.f32 0.0, %v656
        %v673 = vsub.f32 0.0, %v657
        %v674 = vsub.f32 0.0, %v658
        %v675 = vsub.f32 0.0, %v659
        %v676 = vsub.f32 0.0, %v660
        %v677 = vsub.f32 0.0, %v661
        %v678 = vsel %vm662, %v654, %v670
        %v679 = vsel %vm663, %v655, %v671
        %v680 = vsel %vm664, %v656, %v672
        %v681 = vsel %vm665, %v657, %v673
        %v682 = vsel %vm666, %v658, %v674
        %v683 = vsel %vm667, %v659, %v675
        %v684 = vsel %vm668, %v660, %v676
        %v685 = vsel %vm669, %v661, %v677
        %v686 = vmul.f32 %v486, 0.5
        %v687 = vmul.f32 %v487, 0.5
        %v688 = vmul.f32 %v488, 0.5
        %v689 = vmul.f32 %v489, 0.5
        %v690 = vmul.f32 %v490, 0.5
        %v691 = vmul.f32 %v491, 0.5
        %v692 = vmul.f32 %v492, 0.5
        %v693 = vmul.f32 %v493, 0.5
        %v694 = vadd.f32 %v678, 1.0
        %v695 = vadd.f32 %v679, 1.0
        %v696 = vadd.f32 %v680, 1.0
        %v697 = vadd.f32 %v681, 1.0
        %v698 = vadd.f32 %v682, 1.0
        %v699 = vadd.f32 %v683, 1.0
        %v700 = vadd.f32 %v684, 1.0
        %v701 = vadd.f32 %v685, 1.0
        %v702 = vmul.f32 %v686, %v694
        %v703 = vmul.f32 %v687, %v695
        %v704 = vmul.f32 %v688, %v696
        %v705 = vmul.f32 %v689, %v697
        %v706 = vmul.f32 %v690, %v698
        %v707 = vmul.f32 %v691, %v699
        %v708 = vmul.f32 %v692, %v700
        %v709 = vmul.f32 %v693, %v701
        %710 = vst [vmem:[%s218] sm:$0xff] %v702
        %711 = vst [vmem:[%s218 + $0x8] sm:$0xff] %v703
        %712 = vst [vmem:[%s218 + $0x10] sm:$0xff] %v704
        %713 = vst [vmem:[%s218 + $0x18] sm:$0xff] %v705
        %714 = vst [vmem:[%s218 + $0x20] sm:$0xff] %v706
        %715 = vst [vmem:[%s218 + $0x28] sm:$0xff] %v707
        %716 = vst [vmem:[%s218 + $0x30] sm:$0xff] %v708
        %717 = vst [vmem:[%s218 + $0x38] sm:$0xff] %v709
        %s718 = sand.u32 %s137, 1
        %s719 = scalar_lea.sflag [#allocation3], %s718
        %s720 = sand.u32 %s137, 1
        %s721 = smul.addr %s720, 64
        %s722 = scalar_lea.vmem [#allocation2], %s721
        // Predicated region
        $region41: #{tpu_custom_call.1} parent=39 // pred_check
          %p723 = pneg %p147
        $region42: #{tpu_custom_call.1} parent=39 // pred_check_branch
          %725 = sbr.rel (%p723) target = $region44
        $region43: #{tpu_custom_call.1} parent=39 // pred_region
          %s726 = smul.u32 8, %s19
          %s728 = ssub.s32 1024, 1024
          %729 = vsyncadd %s719, %s728
          %s730 = smul.addr %s726, 128
          %s731 = scalar_lea.hbm %s5, %s730
          %s732 = sshll.u32 %s722, 4
          %s733 = int_to_ptr.vmem [resolvable:$true] %s732
          %738 = dma.vmem_to_hbm [thread:$0]  %s733, 1024, %s731, %s719, 128, 128, 8
        $region44: #{tpu_custom_call.1} parent=39 // pred_fallthru
          _
      $region40: #{tpu_custom_call.1} parent=5 // pred_fallthru
        _
      %p739 = scmp.le.s32.totalorder 2, %s14
      // Predicated region
      $region45: #{tpu_custom_call.1} parent=5 // pred_check
        %p740 = pneg %p739
      $region46: #{tpu_custom_call.1} parent=5 // pred_check_branch
        %742 = sbr.rel (%p740) target = $region48
      $region47: #{tpu_custom_call.1} parent=5 // pred_region
        %s743 = ssub.s32 %s14, 2
        // Predicated region
        $region49: #{tpu_custom_call.1} parent=47 // pred_check
          %p744 = pneg %p153
        $region50: #{tpu_custom_call.1} parent=47 // pred_check_branch
          %746 = sbr.rel (%p744) target = $region52
        $region51: #{tpu_custom_call.1} parent=47 // pred_region
          %s747 = sand.u32 %s138, 1
          %s748 = scalar_lea.sflag [#allocation3], %s747
          %s749 = sand.u32 %s138, 1
          %s750 = smul.addr %s749, 64
          %s751 = scalar_lea.vmem [#allocation2], %s750
          %752 = dma.done %s748, 1024
        $region52: #{tpu_custom_call.1} parent=47 // pred_fallthru
          _
      $region48: #{tpu_custom_call.1} parent=5 // pred_fallthru
        _
    $region6: #{tpu_custom_call.1} parent=1 // loop_footer
      %s18 = sadd.s32 1, %s14
    $region7: #{tpu_custom_call.1} parent=1 // loop_footer_branch
      %13 = sbr.rel target = $region3
    $region8: #{tpu_custom_call.1} parent=1 // loop_exit
      _
    %753 = vsyncpa [#allocation3], 1
    %s754 = scalar_lea.sflag [#allocation3], 1
    %755 = vsyncpa %s754, 1

</llo_original>
